<compile_context>
chip_gen: v7x
topology: tpu7x:2x2x1
jax: 0.10.0
libtpu: 0.0.40
codegen_flags: <defaults>
</compile_context>

<pallas_src>
import jax
import jax.numpy as jnp
import numpy as np
from jax.experimental import pallas as pl
from jax.experimental.pallas import tpu as pltpu


def base_fusion_kernel(x_ref, txt_ref, w_ref, b_ref, maskrow_ref, fused_ref, map_scr):
    # x_ref:       (1, N, D)   visual clip features for this batch element (channels-last)
    # txt_ref:     (1, D, 1)   last-valid-token sentence feature (channels on sublanes)
    # w_ref:       (D, D)      conv weight in PyTorch (D_out, D_in) layout, bf16
    # b_ref:       (D, 1)      conv bias (channels on sublanes)
    # maskrow_ref: (1, N*N)    validity of each flattened proposal (end >= start)
    # fused_ref:   (1, D, N*N) output, channels-first, lane-dense (N*N = 256)
    # map_scr:     VMEM (N, N, D) bf16 scratch: map_scr[i, j, :] = max_{t=i..j} x[t, :]
    N = x_ref.shape[1]
    D = x_ref.shape[2]

    x = x_ref[0]                                               # (N, D) f32

    # Sparse max-pool sweep over the *start* index i (reverse order) so every step writes
    # one contiguous (N_end, D) slab: row[j, :] = max_{t=i..j} x[t, :] for j >= i.
    # Rows j < i hold finite don't-care values and are zeroed by the mask at the end,
    # matching the zero-initialized map of the PyTorch reference.
    end_ids = jax.lax.broadcasted_iota(jnp.int32, (N, 1), 0)   # end index per sublane row
    row = jnp.broadcast_to(x[N - 1:N, :], (N, D))
    map_scr[N - 1] = row.astype(map_scr.dtype)
    for step in range(1, N):                                   # static unroll; N is small
        i = N - 1 - step
        xi = x[i:i + 1, :]                                     # (1, D)
        row = jnp.where(end_ids == i, xi, jnp.maximum(row, xi))
        map_scr[i] = row.astype(map_scr.dtype)                 # contiguous (N, D) store

    # 1x1 conv as a single bf16 MXU pass with f32 accumulation, produced directly in
    # channels-first layout: conv_t[o, m] = sum_c W[o, c] * map[m, c].
    flat = map_scr[...].reshape(N * N, D)                      # (N*N, D_in) bf16
    conv_t = jax.lax.dot_general(
        w_ref[...], flat,
        dimension_numbers=(((1,), (1,)), ((), ())),
        preferred_element_type=jnp.float32)                    # (D_out, N*N) f32
    conv_t = conv_t + b_ref[...]                               # (D, 1) bias broadcast

    # Fuse with the sentence feature (broadcast over the N*N proposals on the lane axis).
    prod = conv_t * txt_ref[0]                                 # (D, N*N) * (D, 1)

    # L2-normalize over channels: sublane reduce (XLU) + rsqrt (EUP), VALU stays free.
    sq = jnp.sum(prod * prod, axis=0, keepdims=True)           # (1, N*N)
    normed = prod * jax.lax.rsqrt(jnp.maximum(sq, 1e-24))      # == prod / max(||.||, 1e-12)

    # Zero invalid proposals (end < start) and store lane-dense.
    fused_ref[0] = (normed * maskrow_ref[...]).astype(fused_ref.dtype)


def base_fusion_forward(textual_input, text_len, textual_mask,
                        visual_input, visual_len, visual_mask,
                        conv_weight, conv_bias):
    """JAX/Pallas port of BaseFusion.forward.

    textual_input: (B, L, D), text_len: (B,), visual_input: (B, N, D)
    conv_weight:   (D, D, 1, 1) (PyTorch Conv2d layout), conv_bias: (D,)
    Returns (fused_h (B, D, N, N), map_mask (B, 1, N, N)) — PyTorch NCHW convention.
    """
    del textual_mask, visual_len, visual_mask  # unused by the reference forward
    B, N, D = visual_input.shape

    # glue: gather last valid token feature per batch element, channels on sublanes
    idx = (text_len.astype(jnp.int32) - 1)[:, None, None]            # (B, 1, 1)
    txt_h = jnp.take_along_axis(textual_input, idx, axis=1)          # (B, 1, D)
    txt_t = jnp.transpose(txt_h, (0, 2, 1)).astype(jnp.float32)      # (B, D, 1)

    # glue: 1x1 conv params; weight stays in (D_out, D_in), cast to bf16 for 1-pass MXU
    w2 = conv_weight.reshape(D, D).astype(jnp.bfloat16)              # (D_out, D_in)
    b2 = conv_bias.reshape(D, 1).astype(jnp.float32)                 # (D, 1)

    # batch-invariant validity mask computed once in plain XLA (not a kernel output)
    ii = jnp.arange(N, dtype=jnp.int32)[:, None]
    jj = jnp.arange(N, dtype=jnp.int32)[None, :]
    mask2d = (jj >= ii).astype(jnp.float32)                          # (N, N)
    mask_flat = mask2d.reshape(1, N * N)                             # kernel-side multiply
    map_mask = jnp.broadcast_to(mask2d[None, None], (B, 1, N, N))

    fused_flat = pl.pallas_call(
        base_fusion_kernel,
        out_shape=jax.ShapeDtypeStruct((B, D, N * N), jnp.float32),
        grid_spec=pltpu.PrefetchScalarGridSpec(
            num_scalar_prefetch=0,
            grid=(B,),
            in_specs=[
                pl.BlockSpec((1, N, D), lambda b: (b, 0, 0)),        # visual features
                pl.BlockSpec((1, D, 1), lambda b: (b, 0, 0)),        # text feature (D, 1)
                pl.BlockSpec((D, D), lambda b: (0, 0)),              # conv weight (out, in)
                pl.BlockSpec((D, 1), lambda b: (0, 0)),              # conv bias
                pl.BlockSpec((1, N * N), lambda b: (0, 0)),          # flattened validity mask
            ],
            out_specs=pl.BlockSpec((1, D, N * N), lambda b: (b, 0, 0)),
            scratch_shapes=[pltpu.VMEM((N, N, D), jnp.bfloat16)],
        ),
        compiler_params=pltpu.CompilerParams(dimension_semantics=("parallel",)),
    )(visual_input.astype(jnp.float32), txt_t, w2, b2, mask_flat)

    # (B, D, N*N) is already channels-first; only a free reshape to NCHW (start, end).
    fused_h = fused_flat.reshape(B, D, N, N)
    return fused_h, map_mask


def _reference_numpy(textual_input, text_len, visual_input, conv_weight, conv_bias):
    """Pure numpy reference mirroring the PyTorch forward (f32 throughout)."""
    x = np.asarray(visual_input, np.float32)          # (B, N, D)
    B, N, D = x.shape
    W = np.asarray(conv_weight, np.float32).reshape(D, D)
    bvec = np.asarray(conv_bias, np.float32)
    map_h = np.zeros((B, D, N, N), np.float32)
    map_mask = np.zeros((B, 1, N, N), np.float32)
    for i in range(N):
        for j in range(i, N):
            map_h[:, :, i, j] = x[:, i:j + 1, :].max(axis=1)
            map_mask[:, :, i, j] = 1.0
    conv = np.einsum('oc,bchw->bohw', W, map_h) + bvec.reshape(1, D, 1, 1)
    tl = np.asarray(text_len)
    txt = np.stack([np.asarray(textual_input)[b, tl[b] - 1] for b in range(B)])
    prod = txt[:, :, None, None].astype(np.float32) * conv
    norm = np.sqrt((prod ** 2).sum(axis=1, keepdims=True))
    normed = prod / np.maximum(norm, 1e-12)
    return normed * map_mask, map_mask


if __name__ == "__main__":
    # config = {'hidden_size': 32, 'SparsePropMaxPool': {'NUM_SCALE_LAYERS': [16]}}
    B, L, N, D = 2, 8, 16, 32

    key = jax.random.PRNGKey(0)
    k_txt, k_vis, k_w, k_b = jax.random.split(key, 4)

    textual_input = jax.random.normal(k_txt, (B, L, D), dtype=jnp.float32)
    text_len = jnp.array([5, 8], dtype=jnp.int32)
    textual_mask = (jnp.arange(L)[None, :] < text_len[:, None]).astype(jnp.float32)
    visual_input = jax.random.normal(k_vis, (B, N, D), dtype=jnp.float32)
    visual_len = jnp.full((B,), N, dtype=jnp.int32)
    visual_mask = jnp.ones((B, N), dtype=jnp.float32)

    # deterministic Conv2d(hidden, hidden, 1, 1) parameters
    bound = 1.0 / np.sqrt(D)
    conv_weight = jax.random.uniform(k_w, (D, D, 1, 1), minval=-bound, maxval=bound,
                                     dtype=jnp.float32)
    conv_bias = jax.random.uniform(k_b, (D,), minval=-bound, maxval=bound,
                                   dtype=jnp.float32)

    fused_h, map_mask = base_fusion_forward(
        textual_input, text_len, textual_mask,
        visual_input, visual_len, visual_mask,
        conv_weight, conv_bias)
    fused_h = jax.block_until_ready(fused_h)
    map_mask = jax.block_until_ready(map_mask)

    ref_fused, ref_mask = _reference_numpy(textual_input, text_len, visual_input,
                                           conv_weight, conv_bias)
    np.testing.assert_allclose(np.asarray(map_mask), ref_mask, atol=1e-6)
    # Tolerance reflects the single-pass bf16 MXU matmul (f32 accumulation); the numpy
    # reference is full f32.
    np.testing.assert_allclose(np.asarray(fused_h), ref_fused, rtol=1e-2, atol=1e-2)

    print("KERNEL_OK")
</pallas_src>

<mosaic_0001>
module attributes {stable_mosaic.version = 11 : i64} {
  func.func @base_fusion_kernel(%arg0: i32, %arg1: memref<1x16x32xf32, #tpu.memory_space<vmem>>, %arg2: memref<1x32x1xf32, #tpu.memory_space<vmem>>, %arg3: memref<32x32xbf16, #tpu.memory_space<vmem>>, %arg4: memref<32x1xf32, #tpu.memory_space<vmem>>, %arg5: memref<1x256xf32, #tpu.memory_space<vmem>>, %arg6: memref<1x32x256xf32, #tpu.memory_space<vmem>>, %arg7: memref<16x16x32xbf16, #tpu.memory_space<vmem>>) attributes {dimension_semantics = [#tpu.dimension_semantics<parallel>], iteration_bounds = array<i64: 2>, scalar_prefetch = 0 : i64, scratch_operands = 1 : i64, tpu.core_type = #tpu.core_type<tc>, window_params = [{transform_indices = @transform_0, window_bounds = array<i64: 1, 16, 32>}, {transform_indices = @transform_1, window_bounds = array<i64: 1, 32, 1>}, {pipeline_mode = #tpu.pipeline_mode<synchronous>, transform_indices = @transform_2, window_bounds = array<i64: 32, 32>}, {pipeline_mode = #tpu.pipeline_mode<synchronous>, transform_indices = @transform_3, window_bounds = array<i64: 32, 1>}, {pipeline_mode = #tpu.pipeline_mode<synchronous>, transform_indices = @transform_4, window_bounds = array<i64: 1, 256>}, {transform_indices = @transform_5, window_bounds = array<i64: 1, 32, 256>}]} {
    %c0 = arith.constant 0 : index
    %c0_0 = arith.constant 0 : index
    %c0_1 = arith.constant 0 : index
    %0 = vector.load %arg1[%c0, %c0_0, %c0_1] : memref<1x16x32xf32, #tpu.memory_space<vmem>>, vector<1x16x32xf32>
    %1 = vector.shape_cast %0 : vector<1x16x32xf32> to vector<16x32xf32>
    %2 = tpu.iota {dimensions = array<i32: 0>} : vector<16x1xi32>
    %3 = vector.extract_strided_slice %1 {offsets = [15, 0], sizes = [1, 32], strides = [1, 1]} : vector<16x32xf32> to vector<1x32xf32>
    %4 = vector.shape_cast %3 : vector<1x32xf32> to vector<1x32xf32>
    %5 = vector.broadcast %4 : vector<1x32xf32> to vector<16x32xf32>
    %6 = arith.truncf %5 : vector<16x32xf32> to vector<16x32xbf16>
    %c15 = arith.constant 15 : index
    %c0_2 = arith.constant 0 : index
    %c0_3 = arith.constant 0 : index
    %7 = vector.load %arg7[%c15, %c0_2, %c0_3] : memref<16x16x32xbf16, #tpu.memory_space<vmem>>, vector<1x16x32xbf16>
    %8 = vector.shape_cast %7 : vector<1x16x32xbf16> to vector<16x32xbf16>
    %9 = vector.shape_cast %6 : vector<16x32xbf16> to vector<1x16x32xbf16>
    tpu.vector_store %arg7[%c15, %c0_2, %c0_3], %9 {strides = array<i32>} : memref<16x16x32xbf16, #tpu.memory_space<vmem>>, vector<1x16x32xbf16>,
    %10 = vector.extract_strided_slice %1 {offsets = [14, 0], sizes = [1, 32], strides = [1, 1]} : vector<16x32xf32> to vector<1x32xf32>
    %c14_i32 = arith.constant 14 : i32
    %11 = vector.broadcast %c14_i32 : i32 to vector<16x1xi32>
    %12 = arith.cmpi eq, %2, %11 : vector<16x1xi32>
    %13 = vector.broadcast %10 : vector<1x32xf32> to vector<16x32xf32>
    %14 = arith.maximumf %5, %13 : vector<16x32xf32>
    %15 = vector.shape_cast %12 : vector<16x1xi1> to vector<16x1xi1>
    %16 = vector.broadcast %15 : vector<16x1xi1> to vector<16x32xi1>
    %17 = vector.shape_cast %10 : vector<1x32xf32> to vector<1x32xf32>
    %18 = vector.broadcast %17 : vector<1x32xf32> to vector<16x32xf32>
    %19 = arith.select %16, %18, %14 : vector<16x32xi1>, vector<16x32xf32>
    %20 = arith.truncf %19 : vector<16x32xf32> to vector<16x32xbf16>
    %c14 = arith.constant 14 : index
    %c0_4 = arith.constant 0 : index
    %c0_5 = arith.constant 0 : index
    %21 = vector.load %arg7[%c14, %c0_4, %c0_5] : memref<16x16x32xbf16, #tpu.memory_space<vmem>>, vector<1x16x32xbf16>
    %22 = vector.shape_cast %21 : vector<1x16x32xbf16> to vector<16x32xbf16>
    %23 = vector.shape_cast %20 : vector<16x32xbf16> to vector<1x16x32xbf16>
    tpu.vector_store %arg7[%c14, %c0_4, %c0_5], %23 {strides = array<i32>} : memref<16x16x32xbf16, #tpu.memory_space<vmem>>, vector<1x16x32xbf16>,
    %24 = vector.extract_strided_slice %1 {offsets = [13, 0], sizes = [1, 32], strides = [1, 1]} : vector<16x32xf32> to vector<1x32xf32>
    %c13_i32 = arith.constant 13 : i32
    %25 = vector.broadcast %c13_i32 : i32 to vector<16x1xi32>
    %26 = arith.cmpi eq, %2, %25 : vector<16x1xi32>
    %27 = vector.broadcast %24 : vector<1x32xf32> to vector<16x32xf32>
    %28 = arith.maximumf %19, %27 : vector<16x32xf32>
    %29 = vector.shape_cast %26 : vector<16x1xi1> to vector<16x1xi1>
    %30 = vector.broadcast %29 : vector<16x1xi1> to vector<16x32xi1>
    %31 = vector.shape_cast %24 : vector<1x32xf32> to vector<1x32xf32>
    %32 = vector.broadcast %31 : vector<1x32xf32> to vector<16x32xf32>
    %33 = arith.select %30, %32, %28 : vector<16x32xi1>, vector<16x32xf32>
    %34 = arith.truncf %33 : vector<16x32xf32> to vector<16x32xbf16>
    %c13 = arith.constant 13 : index
    %c0_6 = arith.constant 0 : index
    %c0_7 = arith.constant 0 : index
    %35 = vector.load %arg7[%c13, %c0_6, %c0_7] : memref<16x16x32xbf16, #tpu.memory_space<vmem>>, vector<1x16x32xbf16>
    %36 = vector.shape_cast %35 : vector<1x16x32xbf16> to vector<16x32xbf16>
    %37 = vector.shape_cast %34 : vector<16x32xbf16> to vector<1x16x32xbf16>
    tpu.vector_store %arg7[%c13, %c0_6, %c0_7], %37 {strides = array<i32>} : memref<16x16x32xbf16, #tpu.memory_space<vmem>>, vector<1x16x32xbf16>,
    %38 = vector.extract_strided_slice %1 {offsets = [12, 0], sizes = [1, 32], strides = [1, 1]} : vector<16x32xf32> to vector<1x32xf32>
    %c12_i32 = arith.constant 12 : i32
    %39 = vector.broadcast %c12_i32 : i32 to vector<16x1xi32>
    %40 = arith.cmpi eq, %2, %39 : vector<16x1xi32>
    %41 = vector.broadcast %38 : vector<1x32xf32> to vector<16x32xf32>
    %42 = arith.maximumf %33, %41 : vector<16x32xf32>
    %43 = vector.shape_cast %40 : vector<16x1xi1> to vector<16x1xi1>
    %44 = vector.broadcast %43 : vector<16x1xi1> to vector<16x32xi1>
    %45 = vector.shape_cast %38 : vector<1x32xf32> to vector<1x32xf32>
    %46 = vector.broadcast %45 : vector<1x32xf32> to vector<16x32xf32>
    %47 = arith.select %44, %46, %42 : vector<16x32xi1>, vector<16x32xf32>
    %48 = arith.truncf %47 : vector<16x32xf32> to vector<16x32xbf16>
    %c12 = arith.constant 12 : index
    %c0_8 = arith.constant 0 : index
    %c0_9 = arith.constant 0 : index
    %49 = vector.load %arg7[%c12, %c0_8, %c0_9] : memref<16x16x32xbf16, #tpu.memory_space<vmem>>, vector<1x16x32xbf16>
    %50 = vector.shape_cast %49 : vector<1x16x32xbf16> to vector<16x32xbf16>
    %51 = vector.shape_cast %48 : vector<16x32xbf16> to vector<1x16x32xbf16>
    tpu.vector_store %arg7[%c12, %c0_8, %c0_9], %51 {strides = array<i32>} : memref<16x16x32xbf16, #tpu.memory_space<vmem>>, vector<1x16x32xbf16>,
    %52 = vector.extract_strided_slice %1 {offsets = [11, 0], sizes = [1, 32], strides = [1, 1]} : vector<16x32xf32> to vector<1x32xf32>
    %c11_i32 = arith.constant 11 : i32
    %53 = vector.broadcast %c11_i32 : i32 to vector<16x1xi32>
    %54 = arith.cmpi eq, %2, %53 : vector<16x1xi32>
    %55 = vector.broadcast %52 : vector<1x32xf32> to vector<16x32xf32>
    %56 = arith.maximumf %47, %55 : vector<16x32xf32>
    %57 = vector.shape_cast %54 : vector<16x1xi1> to vector<16x1xi1>
    %58 = vector.broadcast %57 : vector<16x1xi1> to vector<16x32xi1>
    %59 = vector.shape_cast %52 : vector<1x32xf32> to vector<1x32xf32>
    %60 = vector.broadcast %59 : vector<1x32xf32> to vector<16x32xf32>
    %61 = arith.select %58, %60, %56 : vector<16x32xi1>, vector<16x32xf32>
    %62 = arith.truncf %61 : vector<16x32xf32> to vector<16x32xbf16>
    %c11 = arith.constant 11 : index
    %c0_10 = arith.constant 0 : index
    %c0_11 = arith.constant 0 : index
    %63 = vector.load %arg7[%c11, %c0_10, %c0_11] : memref<16x16x32xbf16, #tpu.memory_space<vmem>>, vector<1x16x32xbf16>
    %64 = vector.shape_cast %63 : vector<1x16x32xbf16> to vector<16x32xbf16>
    %65 = vector.shape_cast %62 : vector<16x32xbf16> to vector<1x16x32xbf16>
    tpu.vector_store %arg7[%c11, %c0_10, %c0_11], %65 {strides = array<i32>} : memref<16x16x32xbf16, #tpu.memory_space<vmem>>, vector<1x16x32xbf16>,
    %66 = vector.extract_strided_slice %1 {offsets = [10, 0], sizes = [1, 32], strides = [1, 1]} : vector<16x32xf32> to vector<1x32xf32>
    %c10_i32 = arith.constant 10 : i32
    %67 = vector.broadcast %c10_i32 : i32 to vector<16x1xi32>
    %68 = arith.cmpi eq, %2, %67 : vector<16x1xi32>
    %69 = vector.broadcast %66 : vector<1x32xf32> to vector<16x32xf32>
    %70 = arith.maximumf %61, %69 : vector<16x32xf32>
    %71 = vector.shape_cast %68 : vector<16x1xi1> to vector<16x1xi1>
    %72 = vector.broadcast %71 : vector<16x1xi1> to vector<16x32xi1>
    %73 = vector.shape_cast %66 : vector<1x32xf32> to vector<1x32xf32>
    %74 = vector.broadcast %73 : vector<1x32xf32> to vector<16x32xf32>
    %75 = arith.select %72, %74, %70 : vector<16x32xi1>, vector<16x32xf32>
    %76 = arith.truncf %75 : vector<16x32xf32> to vector<16x32xbf16>
    %c10 = arith.constant 10 : index
    %c0_12 = arith.constant 0 : index
    %c0_13 = arith.constant 0 : index
    %77 = vector.load %arg7[%c10, %c0_12, %c0_13] : memref<16x16x32xbf16, #tpu.memory_space<vmem>>, vector<1x16x32xbf16>
    %78 = vector.shape_cast %77 : vector<1x16x32xbf16> to vector<16x32xbf16>
    %79 = vector.shape_cast %76 : vector<16x32xbf16> to vector<1x16x32xbf16>
    tpu.vector_store %arg7[%c10, %c0_12, %c0_13], %79 {strides = array<i32>} : memref<16x16x32xbf16, #tpu.memory_space<vmem>>, vector<1x16x32xbf16>,
    %80 = vector.extract_strided_slice %1 {offsets = [9, 0], sizes = [1, 32], strides = [1, 1]} : vector<16x32xf32> to vector<1x32xf32>
    %c9_i32 = arith.constant 9 : i32
    %81 = vector.broadcast %c9_i32 : i32 to vector<16x1xi32>
    %82 = arith.cmpi eq, %2, %81 : vector<16x1xi32>
    %83 = vector.broadcast %80 : vector<1x32xf32> to vector<16x32xf32>
    %84 = arith.maximumf %75, %83 : vector<16x32xf32>
    %85 = vector.shape_cast %82 : vector<16x1xi1> to vector<16x1xi1>
    %86 = vector.broadcast %85 : vector<16x1xi1> to vector<16x32xi1>
    %87 = vector.shape_cast %80 : vector<1x32xf32> to vector<1x32xf32>
    %88 = vector.broadcast %87 : vector<1x32xf32> to vector<16x32xf32>
    %89 = arith.select %86, %88, %84 : vector<16x32xi1>, vector<16x32xf32>
    %90 = arith.truncf %89 : vector<16x32xf32> to vector<16x32xbf16>
    %c9 = arith.constant 9 : index
    %c0_14 = arith.constant 0 : index
    %c0_15 = arith.constant 0 : index
    %91 = vector.load %arg7[%c9, %c0_14, %c0_15] : memref<16x16x32xbf16, #tpu.memory_space<vmem>>, vector<1x16x32xbf16>
    %92 = vector.shape_cast %91 : vector<1x16x32xbf16> to vector<16x32xbf16>
    %93 = vector.shape_cast %90 : vector<16x32xbf16> to vector<1x16x32xbf16>
    tpu.vector_store %arg7[%c9, %c0_14, %c0_15], %93 {strides = array<i32>} : memref<16x16x32xbf16, #tpu.memory_space<vmem>>, vector<1x16x32xbf16>,
    %94 = vector.extract_strided_slice %1 {offsets = [8, 0], sizes = [1, 32], strides = [1, 1]} : vector<16x32xf32> to vector<1x32xf32>
    %c8_i32 = arith.constant 8 : i32
    %95 = vector.broadcast %c8_i32 : i32 to vector<16x1xi32>
    %96 = arith.cmpi eq, %2, %95 : vector<16x1xi32>
    %97 = vector.broadcast %94 : vector<1x32xf32> to vector<16x32xf32>
    %98 = arith.maximumf %89, %97 : vector<16x32xf32>
    %99 = vector.shape_cast %96 : vector<16x1xi1> to vector<16x1xi1>
    %100 = vector.broadcast %99 : vector<16x1xi1> to vector<16x32xi1>
    %101 = vector.shape_cast %94 : vector<1x32xf32> to vector<1x32xf32>
    %102 = vector.broadcast %101 : vector<1x32xf32> to vector<16x32xf32>
    %103 = arith.select %100, %102, %98 : vector<16x32xi1>, vector<16x32xf32>
    %104 = arith.truncf %103 : vector<16x32xf32> to vector<16x32xbf16>
    %c8 = arith.constant 8 : index
    %c0_16 = arith.constant 0 : index
    %c0_17 = arith.constant 0 : index
    %105 = vector.load %arg7[%c8, %c0_16, %c0_17] : memref<16x16x32xbf16, #tpu.memory_space<vmem>>, vector<1x16x32xbf16>
    %106 = vector.shape_cast %105 : vector<1x16x32xbf16> to vector<16x32xbf16>
    %107 = vector.shape_cast %104 : vector<16x32xbf16> to vector<1x16x32xbf16>
    tpu.vector_store %arg7[%c8, %c0_16, %c0_17], %107 {strides = array<i32>} : memref<16x16x32xbf16, #tpu.memory_space<vmem>>, vector<1x16x32xbf16>,
    %108 = vector.extract_strided_slice %1 {offsets = [7, 0], sizes = [1, 32], strides = [1, 1]} : vector<16x32xf32> to vector<1x32xf32>
    %c7_i32 = arith.constant 7 : i32
    %109 = vector.broadcast %c7_i32 : i32 to vector<16x1xi32>
    %110 = arith.cmpi eq, %2, %109 : vector<16x1xi32>
    %111 = vector.broadcast %108 : vector<1x32xf32> to vector<16x32xf32>
    %112 = arith.maximumf %103, %111 : vector<16x32xf32>
    %113 = vector.shape_cast %110 : vector<16x1xi1> to vector<16x1xi1>
    %114 = vector.broadcast %113 : vector<16x1xi1> to vector<16x32xi1>
    %115 = vector.shape_cast %108 : vector<1x32xf32> to vector<1x32xf32>
    %116 = vector.broadcast %115 : vector<1x32xf32> to vector<16x32xf32>
    %117 = arith.select %114, %116, %112 : vector<16x32xi1>, vector<16x32xf32>
    %118 = arith.truncf %117 : vector<16x32xf32> to vector<16x32xbf16>
    %c7 = arith.constant 7 : index
    %c0_18 = arith.constant 0 : index
    %c0_19 = arith.constant 0 : index
    %119 = vector.load %arg7[%c7, %c0_18, %c0_19] : memref<16x16x32xbf16, #tpu.memory_space<vmem>>, vector<1x16x32xbf16>
    %120 = vector.shape_cast %119 : vector<1x16x32xbf16> to vector<16x32xbf16>
    %121 = vector.shape_cast %118 : vector<16x32xbf16> to vector<1x16x32xbf16>
    tpu.vector_store %arg7[%c7, %c0_18, %c0_19], %121 {strides = array<i32>} : memref<16x16x32xbf16, #tpu.memory_space<vmem>>, vector<1x16x32xbf16>,
    %122 = vector.extract_strided_slice %1 {offsets = [6, 0], sizes = [1, 32], strides = [1, 1]} : vector<16x32xf32> to vector<1x32xf32>
    %c6_i32 = arith.constant 6 : i32
    %123 = vector.broadcast %c6_i32 : i32 to vector<16x1xi32>
    %124 = arith.cmpi eq, %2, %123 : vector<16x1xi32>
    %125 = vector.broadcast %122 : vector<1x32xf32> to vector<16x32xf32>
    %126 = arith.maximumf %117, %125 : vector<16x32xf32>
    %127 = vector.shape_cast %124 : vector<16x1xi1> to vector<16x1xi1>
    %128 = vector.broadcast %127 : vector<16x1xi1> to vector<16x32xi1>
    %129 = vector.shape_cast %122 : vector<1x32xf32> to vector<1x32xf32>
    %130 = vector.broadcast %129 : vector<1x32xf32> to vector<16x32xf32>
    %131 = arith.select %128, %130, %126 : vector<16x32xi1>, vector<16x32xf32>
    %132 = arith.truncf %131 : vector<16x32xf32> to vector<16x32xbf16>
    %c6 = arith.constant 6 : index
    %c0_20 = arith.constant 0 : index
    %c0_21 = arith.constant 0 : index
    %133 = vector.load %arg7[%c6, %c0_20, %c0_21] : memref<16x16x32xbf16, #tpu.memory_space<vmem>>, vector<1x16x32xbf16>
    %134 = vector.shape_cast %133 : vector<1x16x32xbf16> to vector<16x32xbf16>
    %135 = vector.shape_cast %132 : vector<16x32xbf16> to vector<1x16x32xbf16>
    tpu.vector_store %arg7[%c6, %c0_20, %c0_21], %135 {strides = array<i32>} : memref<16x16x32xbf16, #tpu.memory_space<vmem>>, vector<1x16x32xbf16>,
    %136 = vector.extract_strided_slice %1 {offsets = [5, 0], sizes = [1, 32], strides = [1, 1]} : vector<16x32xf32> to vector<1x32xf32>
    %c5_i32 = arith.constant 5 : i32
    %137 = vector.broadcast %c5_i32 : i32 to vector<16x1xi32>
    %138 = arith.cmpi eq, %2, %137 : vector<16x1xi32>
    %139 = vector.broadcast %136 : vector<1x32xf32> to vector<16x32xf32>
    %140 = arith.maximumf %131, %139 : vector<16x32xf32>
    %141 = vector.shape_cast %138 : vector<16x1xi1> to vector<16x1xi1>
    %142 = vector.broadcast %141 : vector<16x1xi1> to vector<16x32xi1>
    %143 = vector.shape_cast %136 : vector<1x32xf32> to vector<1x32xf32>
    %144 = vector.broadcast %143 : vector<1x32xf32> to vector<16x32xf32>
    %145 = arith.select %142, %144, %140 : vector<16x32xi1>, vector<16x32xf32>
    %146 = arith.truncf %145 : vector<16x32xf32> to vector<16x32xbf16>
    %c5 = arith.constant 5 : index
    %c0_22 = arith.constant 0 : index
    %c0_23 = arith.constant 0 : index
    %147 = vector.load %arg7[%c5, %c0_22, %c0_23] : memref<16x16x32xbf16, #tpu.memory_space<vmem>>, vector<1x16x32xbf16>
    %148 = vector.shape_cast %147 : vector<1x16x32xbf16> to vector<16x32xbf16>
    %149 = vector.shape_cast %146 : vector<16x32xbf16> to vector<1x16x32xbf16>
    tpu.vector_store %arg7[%c5, %c0_22, %c0_23], %149 {strides = array<i32>} : memref<16x16x32xbf16, #tpu.memory_space<vmem>>, vector<1x16x32xbf16>,
    %150 = vector.extract_strided_slice %1 {offsets = [4, 0], sizes = [1, 32], strides = [1, 1]} : vector<16x32xf32> to vector<1x32xf32>
    %c4_i32 = arith.constant 4 : i32
    %151 = vector.broadcast %c4_i32 : i32 to vector<16x1xi32>
    %152 = arith.cmpi eq, %2, %151 : vector<16x1xi32>
    %153 = vector.broadcast %150 : vector<1x32xf32> to vector<16x32xf32>
    %154 = arith.maximumf %145, %153 : vector<16x32xf32>
    %155 = vector.shape_cast %152 : vector<16x1xi1> to vector<16x1xi1>
    %156 = vector.broadcast %155 : vector<16x1xi1> to vector<16x32xi1>
    %157 = vector.shape_cast %150 : vector<1x32xf32> to vector<1x32xf32>
    %158 = vector.broadcast %157 : vector<1x32xf32> to vector<16x32xf32>
    %159 = arith.select %156, %158, %154 : vector<16x32xi1>, vector<16x32xf32>
    %160 = arith.truncf %159 : vector<16x32xf32> to vector<16x32xbf16>
    %c4 = arith.constant 4 : index
    %c0_24 = arith.constant 0 : index
    %c0_25 = arith.constant 0 : index
    %161 = vector.load %arg7[%c4, %c0_24, %c0_25] : memref<16x16x32xbf16, #tpu.memory_space<vmem>>, vector<1x16x32xbf16>
    %162 = vector.shape_cast %161 : vector<1x16x32xbf16> to vector<16x32xbf16>
    %163 = vector.shape_cast %160 : vector<16x32xbf16> to vector<1x16x32xbf16>
    tpu.vector_store %arg7[%c4, %c0_24, %c0_25], %163 {strides = array<i32>} : memref<16x16x32xbf16, #tpu.memory_space<vmem>>, vector<1x16x32xbf16>,
    %164 = vector.extract_strided_slice %1 {offsets = [3, 0], sizes = [1, 32], strides = [1, 1]} : vector<16x32xf32> to vector<1x32xf32>
    %c3_i32 = arith.constant 3 : i32
    %165 = vector.broadcast %c3_i32 : i32 to vector<16x1xi32>
    %166 = arith.cmpi eq, %2, %165 : vector<16x1xi32>
    %167 = vector.broadcast %164 : vector<1x32xf32> to vector<16x32xf32>
    %168 = arith.maximumf %159, %167 : vector<16x32xf32>
    %169 = vector.shape_cast %166 : vector<16x1xi1> to vector<16x1xi1>
    %170 = vector.broadcast %169 : vector<16x1xi1> to vector<16x32xi1>
    %171 = vector.shape_cast %164 : vector<1x32xf32> to vector<1x32xf32>
    %172 = vector.broadcast %171 : vector<1x32xf32> to vector<16x32xf32>
    %173 = arith.select %170, %172, %168 : vector<16x32xi1>, vector<16x32xf32>
    %174 = arith.truncf %173 : vector<16x32xf32> to vector<16x32xbf16>
    %c3 = arith.constant 3 : index
    %c0_26 = arith.constant 0 : index
    %c0_27 = arith.constant 0 : index
    %175 = vector.load %arg7[%c3, %c0_26, %c0_27] : memref<16x16x32xbf16, #tpu.memory_space<vmem>>, vector<1x16x32xbf16>
    %176 = vector.shape_cast %175 : vector<1x16x32xbf16> to vector<16x32xbf16>
    %177 = vector.shape_cast %174 : vector<16x32xbf16> to vector<1x16x32xbf16>
    tpu.vector_store %arg7[%c3, %c0_26, %c0_27], %177 {strides = array<i32>} : memref<16x16x32xbf16, #tpu.memory_space<vmem>>, vector<1x16x32xbf16>,
    %178 = vector.extract_strided_slice %1 {offsets = [2, 0], sizes = [1, 32], strides = [1, 1]} : vector<16x32xf32> to vector<1x32xf32>
    %c2_i32 = arith.constant 2 : i32
    %179 = vector.broadcast %c2_i32 : i32 to vector<16x1xi32>
    %180 = arith.cmpi eq, %2, %179 : vector<16x1xi32>
    %181 = vector.broadcast %178 : vector<1x32xf32> to vector<16x32xf32>
    %182 = arith.maximumf %173, %181 : vector<16x32xf32>
    %183 = vector.shape_cast %180 : vector<16x1xi1> to vector<16x1xi1>
    %184 = vector.broadcast %183 : vector<16x1xi1> to vector<16x32xi1>
    %185 = vector.shape_cast %178 : vector<1x32xf32> to vector<1x32xf32>
    %186 = vector.broadcast %185 : vector<1x32xf32> to vector<16x32xf32>
    %187 = arith.select %184, %186, %182 : vector<16x32xi1>, vector<16x32xf32>
    %188 = arith.truncf %187 : vector<16x32xf32> to vector<16x32xbf16>
    %c2 = arith.constant 2 : index
    %c0_28 = arith.constant 0 : index
    %c0_29 = arith.constant 0 : index
    %189 = vector.load %arg7[%c2, %c0_28, %c0_29] : memref<16x16x32xbf16, #tpu.memory_space<vmem>>, vector<1x16x32xbf16>
    %190 = vector.shape_cast %189 : vector<1x16x32xbf16> to vector<16x32xbf16>
    %191 = vector.shape_cast %188 : vector<16x32xbf16> to vector<1x16x32xbf16>
    tpu.vector_store %arg7[%c2, %c0_28, %c0_29], %191 {strides = array<i32>} : memref<16x16x32xbf16, #tpu.memory_space<vmem>>, vector<1x16x32xbf16>,
    %192 = vector.extract_strided_slice %1 {offsets = [1, 0], sizes = [1, 32], strides = [1, 1]} : vector<16x32xf32> to vector<1x32xf32>
    %c1_i32 = arith.constant 1 : i32
    %193 = vector.broadcast %c1_i32 : i32 to vector<16x1xi32>
    %194 = arith.cmpi eq, %2, %193 : vector<16x1xi32>
    %195 = vector.broadcast %192 : vector<1x32xf32> to vector<16x32xf32>
    %196 = arith.maximumf %187, %195 : vector<16x32xf32>
    %197 = vector.shape_cast %194 : vector<16x1xi1> to vector<16x1xi1>
    %198 = vector.broadcast %197 : vector<16x1xi1> to vector<16x32xi1>
    %199 = vector.shape_cast %192 : vector<1x32xf32> to vector<1x32xf32>
    %200 = vector.broadcast %199 : vector<1x32xf32> to vector<16x32xf32>
    %201 = arith.select %198, %200, %196 : vector<16x32xi1>, vector<16x32xf32>
    %202 = arith.truncf %201 : vector<16x32xf32> to vector<16x32xbf16>
    %c1 = arith.constant 1 : index
    %c0_30 = arith.constant 0 : index
    %c0_31 = arith.constant 0 : index
    %203 = vector.load %arg7[%c1, %c0_30, %c0_31] : memref<16x16x32xbf16, #tpu.memory_space<vmem>>, vector<1x16x32xbf16>
    %204 = vector.shape_cast %203 : vector<1x16x32xbf16> to vector<16x32xbf16>
    %205 = vector.shape_cast %202 : vector<16x32xbf16> to vector<1x16x32xbf16>
    tpu.vector_store %arg7[%c1, %c0_30, %c0_31], %205 {strides = array<i32>} : memref<16x16x32xbf16, #tpu.memory_space<vmem>>, vector<1x16x32xbf16>,
    %206 = vector.extract_strided_slice %1 {offsets = [0, 0], sizes = [1, 32], strides = [1, 1]} : vector<16x32xf32> to vector<1x32xf32>
    %c0_i32 = arith.constant 0 : i32
    %207 = vector.broadcast %c0_i32 : i32 to vector<16x1xi32>
    %208 = arith.cmpi eq, %2, %207 : vector<16x1xi32>
    %209 = vector.broadcast %206 : vector<1x32xf32> to vector<16x32xf32>
    %210 = arith.maximumf %201, %209 : vector<16x32xf32>
    %211 = vector.shape_cast %208 : vector<16x1xi1> to vector<16x1xi1>
    %212 = vector.broadcast %211 : vector<16x1xi1> to vector<16x32xi1>
    %213 = vector.shape_cast %206 : vector<1x32xf32> to vector<1x32xf32>
    %214 = vector.broadcast %213 : vector<1x32xf32> to vector<16x32xf32>
    %215 = arith.select %212, %214, %210 : vector<16x32xi1>, vector<16x32xf32>
    %216 = arith.truncf %215 : vector<16x32xf32> to vector<16x32xbf16>
    %c0_32 = arith.constant 0 : index
    %c0_33 = arith.constant 0 : index
    %c0_34 = arith.constant 0 : index
    %217 = vector.load %arg7[%c0_32, %c0_33, %c0_34] : memref<16x16x32xbf16, #tpu.memory_space<vmem>>, vector<1x16x32xbf16>
    %218 = vector.shape_cast %217 : vector<1x16x32xbf16> to vector<16x32xbf16>
    %219 = vector.shape_cast %216 : vector<16x32xbf16> to vector<1x16x32xbf16>
    tpu.vector_store %arg7[%c0_32, %c0_33, %c0_34], %219 {strides = array<i32>} : memref<16x16x32xbf16, #tpu.memory_space<vmem>>, vector<1x16x32xbf16>,
    %c0_35 = arith.constant 0 : index
    %c0_36 = arith.constant 0 : index
    %c0_37 = arith.constant 0 : index
    %220 = vector.load %arg7[%c0_35, %c0_36, %c0_37] : memref<16x16x32xbf16, #tpu.memory_space<vmem>>, vector<16x16x32xbf16>
    %221 = vector.shape_cast %220 : vector<16x16x32xbf16> to vector<256x32xbf16>
    %c0_38 = arith.constant 0 : index
    %c0_39 = arith.constant 0 : index
    %222 = vector.load %arg3[%c0_38, %c0_39] : memref<32x32xbf16, #tpu.memory_space<vmem>>, vector<32x32xbf16>
    %cst = arith.constant dense<0.000000e+00> : vector<32x256xf32>
    %223 = tpu.matmul %222, %221, %cst {dimension_numbers = #tpu.dot_dimension_numbers<[1], [1], [0], [0], [0, 0, 1, 0], [], []>} : vector<32x32xbf16>, vector<256x32xbf16>, vector<32x256xf32> -> vector<32x256xf32>
    %c0_40 = arith.constant 0 : index
    %c0_41 = arith.constant 0 : index
    %224 = vector.load %arg4[%c0_40, %c0_41] : memref<32x1xf32, #tpu.memory_space<vmem>>, vector<32x1xf32>
    %225 = vector.broadcast %224 : vector<32x1xf32> to vector<32x256xf32>
    %226 = arith.addf %223, %225 : vector<32x256xf32>
    %c0_42 = arith.constant 0 : index
    %c0_43 = arith.constant 0 : index
    %c0_44 = arith.constant 0 : index
    %227 = vector.load %arg2[%c0_42, %c0_43, %c0_44] : memref<1x32x1xf32, #tpu.memory_space<vmem>>, vector<1x32x1xf32>
    %228 = vector.shape_cast %227 : vector<1x32x1xf32> to vector<32x1xf32>
    %229 = vector.broadcast %228 : vector<32x1xf32> to vector<32x256xf32>
    %230 = arith.mulf %226, %229 : vector<32x256xf32>
    %231 = arith.mulf %230, %230 : vector<32x256xf32>
    %cst_45 = arith.constant dense<0.000000e+00> : vector<256xf32>
    %232 = vector.multi_reduction <add>, %231, %cst_45 [0] : vector<32x256xf32> to vector<256xf32>
    %233 = vector.shape_cast %232 : vector<256xf32> to vector<1x256xf32>
    %cst_46 = arith.constant 1.000000e-24 : f32
    %234 = vector.broadcast %cst_46 : f32 to vector<1x256xf32>
    %235 = arith.maximumf %233, %234 : vector<1x256xf32>
    %236 = math.rsqrt %235 : vector<1x256xf32>
    %237 = vector.broadcast %236 : vector<1x256xf32> to vector<32x256xf32>
    %238 = arith.mulf %230, %237 : vector<32x256xf32>
    %c0_47 = arith.constant 0 : index
    %c0_48 = arith.constant 0 : index
    %239 = vector.load %arg5[%c0_47, %c0_48] : memref<1x256xf32, #tpu.memory_space<vmem>>, vector<1x256xf32>
    %240 = vector.broadcast %239 : vector<1x256xf32> to vector<32x256xf32>
    %241 = arith.mulf %238, %240 : vector<32x256xf32>
    %c0_49 = arith.constant 0 : index
    %c0_50 = arith.constant 0 : index
    %c0_51 = arith.constant 0 : index
    %242 = vector.load %arg6[%c0_49, %c0_50, %c0_51] : memref<1x32x256xf32, #tpu.memory_space<vmem>>, vector<1x32x256xf32>
    %243 = vector.shape_cast %242 : vector<1x32x256xf32> to vector<32x256xf32>
    %244 = vector.shape_cast %241 : vector<32x256xf32> to vector<1x32x256xf32>
    tpu.vector_store %arg6[%c0_49, %c0_50, %c0_51], %244 {strides = array<i32>} : memref<1x32x256xf32, #tpu.memory_space<vmem>>, vector<1x32x256xf32>,
    return
  }
  func.func @transform_0(%arg0: i32) -> (i32, i32, i32) {
    %c0_i32 = arith.constant 0 : i32
    %c0_i32_0 = arith.constant 0 : i32
    %c0_i32_1 = arith.constant 0 : i32
    return %arg0, %c0_i32, %c0_i32_0 : i32, i32, i32
  }
  func.func @transform_1(%arg0: i32) -> (i32, i32, i32) {
    %c0_i32 = arith.constant 0 : i32
    %c0_i32_0 = arith.constant 0 : i32
    %c0_i32_1 = arith.constant 0 : i32
    return %arg0, %c0_i32, %c0_i32_0 : i32, i32, i32
  }
  func.func @transform_2(%arg0: i32) -> (i32, i32) {
    %c0_i32 = arith.constant 0 : i32
    %c0_i32_0 = arith.constant 0 : i32
    %c0_i32_1 = arith.constant 0 : i32
    return %c0_i32, %c0_i32_0 : i32, i32
  }
  func.func @transform_3(%arg0: i32) -> (i32, i32) {
    %c0_i32 = arith.constant 0 : i32
    %c0_i32_0 = arith.constant 0 : i32
    %c0_i32_1 = arith.constant 0 : i32
    return %c0_i32, %c0_i32_0 : i32, i32
  }
  func.func @transform_4(%arg0: i32) -> (i32, i32) {
    %c0_i32 = arith.constant 0 : i32
    %c0_i32_0 = arith.constant 0 : i32
    %c0_i32_1 = arith.constant 0 : i32
    return %c0_i32, %c0_i32_0 : i32, i32
  }
  func.func @transform_5(%arg0: i32) -> (i32, i32, i32) {
    %c0_i32 = arith.constant 0 : i32
    %c0_i32_0 = arith.constant 0 : i32
    %c0_i32_1 = arith.constant 0 : i32
    return %arg0, %c0_i32, %c0_i32_0 : i32, i32, i32
  }
}

</mosaic_0001>

<llo_original>
// kernel: tpu_custom_call.1
$region0: #{tpu_custom_call.1}
  #allocation0 [shape = 'u32[]', space=smem, size = 0x4, offset = 0x4, fixed_abs, tag = 'smem constant byte address 0x4 - core index']
  #allocation1 [shape = 'u32[144,128]{1,0:T(1,128)}', space=vmem, size = 0x12000, scoped, tag = 'internal scratch']
  #allocation2 [shape = 'bf16[16,16,32]{2,1,0:T(16,128)(2,1)}', space=vmem, size = 0x10000, scoped, tag = 'scratch operand']
  %s0 = inlined_call_operand.vmem [shape: f32[2,16,32], index: 0, kind: input, shape index: {}]
  %s1 = inlined_call_operand.vmem [shape: f32[2,32,1], index: 1, kind: input, shape index: {}]
  %s2 = inlined_call_operand.vmem [shape: bf16[32,32], index: 2, kind: input, shape index: {}]
  %s3 = inlined_call_operand.vmem [shape: f32[32,1], index: 3, kind: input, shape index: {}]
  %s4 = inlined_call_operand.vmem [shape: f32[1,256], index: 4, kind: input, shape index: {}]
  %s5 = inlined_call_operand.hbm [shape: f32[2,32,256], index: 5, kind: output, shape index: {}]
  %s6 = sld [smem:[#allocation0]]
  $region53: #{tpu_custom_call.1} parent=0
    _
  %s8 = ssub.s32 1, %s6
  %s9 = scalar_select 0, %s8, %s6
  $region1: #{tpu_custom_call.1} parent=0
    #allocation3 [shape = 'u8[65536]{0}', space=vmem, size = 0x10000, scoped, tag = 'output window, operand 0']
    #allocation4 [shape = 's32[2]{0}', space=sflag, size = 0x8, scoped, tag = 'scoped memory for tpu_custom_call.1']
    %10 = vsyncpa [#allocation4], 0
    %s11 = scalar_lea.sflag [#allocation4], 1
    %12 = vsyncpa %s11, 0
    loop: start=0, step=1, limit=4
    $region2: #{tpu_custom_call.1} parent=1 // loop_pre_header
      _
    $region3: #{tpu_custom_call.1} parent=1 // loop_header
      %s14 = sphi 0, %s18
      %p15 = scmp.ge.s32.totalorder %s14, 4
      %s24 = sphi 0, %s26
      %s27 = sphi 0, %s24
      %s28 = sphi 0, %s27
      %s44 = sphi 0, %s28
      %s50 = sphi 0, %s52
      %s53 = sphi 0, %s50
      %s54 = sphi 0, %s53
      %s70 = sphi 0, %s54
      %s74 = sphi 0, %s74
      %s76 = sphi 0, %s74
      %s77 = sphi 0, %s76
      %s91 = sphi 0, %s77
      %s95 = sphi 0, %s95
      %s97 = sphi 0, %s95
      %s98 = sphi 0, %s97
      %s112 = sphi 0, %s98
      %s116 = sphi 0, %s116
      %s118 = sphi 0, %s116
      %s119 = sphi 0, %s118
      %s133 = sphi 0, %s119
      %s139 = sphi 0, %s141
      %s142 = sphi 0, %s139
      %s143 = sphi 0, %s142
      %s159 = sphi 0, %s143
    $region4: #{tpu_custom_call.1} parent=1 // loop_header_branch
      %17 = sbr.rel (%p15) target = $region8
    $region5: #{tpu_custom_call.1} parent=1 // loop_body
      %s19 = ssub.s32 %s14, 1
      %s20 = ssub.s32 %s14, 2
      %s21 = sadd.s32 %s14, 1
      %s22 = ssub.s32 %s14, %s21
      %p23 = scmp.eq.s32.totalorder %s22, 0
      %s25 = sadd.s32 %s24, 1
      %s26 = scalar_select %p23, %s24, %s25
      %p29 = pneg %p23
      %p30 = scmp.eq.s32.totalorder %s14, 1
      %p31 = por %p29, %p30
      %p32 = scmp.ne.s32.totalorder %s24, %s27
      %p33 = scmp.eq.s32.totalorder %s14, 0
      %p34 = por %p32, %p33
      %p35 = scmp.ne.s32.totalorder %s24, %s27
      %p36 = scmp.eq.s32.totalorder %s19, 1
      %p37 = por %p35, %p36
      %p38 = scmp.ne.s32.totalorder %s27, %s28
      %p39 = scmp.eq.s32.totalorder %s19, 0
      %p40 = por %p38, %p39
      %p41 = scmp.ne.s32.totalorder %s27, %s28
      %p42 = scmp.eq.s32.totalorder %s20, 1
      %p43 = por %p41, %p42
      %p45 = scmp.ne.s32.totalorder %s28, %s44
      %p46 = scmp.eq.s32.totalorder %s20, 0
      %p47 = por %p45, %p46
      %s48 = ssub.s32 %s14, %s21
      %p49 = scmp.eq.s32.totalorder %s48, 0
      %s51 = sadd.s32 %s50, 1
      %s52 = scalar_select %p49, %s50, %s51
      %p55 = pneg %p49
      %p56 = scmp.eq.s32.totalorder %s14, 1
      %p57 = por %p55, %p56
      %p58 = scmp.ne.s32.totalorder %s50, %s53
      %p59 = scmp.eq.s32.totalorder %s14, 0
      %p60 = por %p58, %p59
      %p61 = scmp.ne.s32.totalorder %s50, %s53
      %p62 = scmp.eq.s32.totalorder %s19, 1
      %p63 = por %p61, %p62
      %p64 = scmp.ne.s32.totalorder %s53, %s54
      %p65 = scmp.eq.s32.totalorder %s19, 0
      %p66 = por %p64, %p65
      %p67 = scmp.ne.s32.totalorder %s53, %s54
      %p68 = scmp.eq.s32.totalorder %s20, 1
      %p69 = por %p67, %p68
      %p71 = scmp.ne.s32.totalorder %s54, %s70
      %p72 = scmp.eq.s32.totalorder %s20, 0
      %p73 = por %p71, %p72
      %s75 = sadd.s32 %s74, 1
      %p78 = scmp.eq.s32.totalorder %s14, 1
      %p79 = scmp.ne.s32.totalorder %s74, %s76
      %p80 = scmp.eq.s32.totalorder %s14, 0
      %p81 = por %p79, %p80
      %p82 = scmp.ne.s32.totalorder %s74, %s76
      %p83 = scmp.eq.s32.totalorder %s19, 1
      %p84 = por %p82, %p83
      %p85 = scmp.ne.s32.totalorder %s76, %s77
      %p86 = scmp.eq.s32.totalorder %s19, 0
      %p87 = por %p85, %p86
      %p88 = scmp.ne.s32.totalorder %s76, %s77
      %p89 = scmp.eq.s32.totalorder %s20, 1
      %p90 = por %p88, %p89
      %p92 = scmp.ne.s32.totalorder %s77, %s91
      %p93 = scmp.eq.s32.totalorder %s20, 0
      %p94 = por %p92, %p93
      %s96 = sadd.s32 %s95, 1
      %p99 = scmp.eq.s32.totalorder %s14, 1
      %p100 = scmp.ne.s32.totalorder %s95, %s97
      %p101 = scmp.eq.s32.totalorder %s14, 0
      %p102 = por %p100, %p101
      %p103 = scmp.ne.s32.totalorder %s95, %s97
      %p104 = scmp.eq.s32.totalorder %s19, 1
      %p105 = por %p103, %p104
      %p106 = scmp.ne.s32.totalorder %s97, %s98
      %p107 = scmp.eq.s32.totalorder %s19, 0
      %p108 = por %p106, %p107
      %p109 = scmp.ne.s32.totalorder %s97, %s98
      %p110 = scmp.eq.s32.totalorder %s20, 1
      %p111 = por %p109, %p110
      %p113 = scmp.ne.s32.totalorder %s98, %s112
      %p114 = scmp.eq.s32.totalorder %s20, 0
      %p115 = por %p113, %p114
      %s117 = sadd.s32 %s116, 1
      %p120 = scmp.eq.s32.totalorder %s14, 1
      %p121 = scmp.ne.s32.totalorder %s116, %s118
      %p122 = scmp.eq.s32.totalorder %s14, 0
      %p123 = por %p121, %p122
      %p124 = scmp.ne.s32.totalorder %s116, %s118
      %p125 = scmp.eq.s32.totalorder %s19, 1
      %p126 = por %p124, %p125
      %p127 = scmp.ne.s32.totalorder %s118, %s119
      %p128 = scmp.eq.s32.totalorder %s19, 0
      %p129 = por %p127, %p128
      %p130 = scmp.ne.s32.totalorder %s118, %s119
      %p131 = scmp.eq.s32.totalorder %s20, 1
      %p132 = por %p130, %p131
      %p134 = scmp.ne.s32.totalorder %s119, %s133
      %p135 = scmp.eq.s32.totalorder %s20, 0
      %p136 = por %p134, %p135
      %s137 = ssub.s32 %s14, %s21
      %p138 = scmp.eq.s32.totalorder %s137, 0
      %s140 = sadd.s32 %s139, 1
      %s141 = scalar_select %p138, %s139, %s140
      %p144 = pneg %p138
      %p145 = scmp.eq.s32.totalorder %s14, 1
      %p146 = por %p144, %p145
      %p147 = scmp.ne.s32.totalorder %s139, %s142
      %p148 = scmp.eq.s32.totalorder %s14, 0
      %p149 = por %p147, %p148
      %p150 = scmp.ne.s32.totalorder %s139, %s142
      %p151 = scmp.eq.s32.totalorder %s19, 1
      %p152 = por %p150, %p151
      %p153 = scmp.ne.s32.totalorder %s142, %s143
      %p154 = scmp.eq.s32.totalorder %s19, 0
      %p155 = por %p153, %p154
      %p156 = scmp.ne.s32.totalorder %s142, %s143
      %p157 = scmp.eq.s32.totalorder %s20, 1
      %p158 = por %p156, %p157
      %p160 = scmp.ne.s32.totalorder %s143, %s159
      %p161 = scmp.eq.s32.totalorder %s20, 0
      %p162 = por %p160, %p161
      %p163 = scmp.le.s32.totalorder 1, %s14
      %p164 = scmp.lt.s32.totalorder %s14, 3
      %p165 = pnand %p163, %p164
      %p166 = pneg %p165
      // Predicated region
      $region9: #{tpu_custom_call.1} parent=5 // pred_check
        _
      $region10: #{tpu_custom_call.1} parent=5 // pred_check_branch
        %168 = sbr.rel (%p165) target = $region12
      $region11: #{tpu_custom_call.1} parent=5 // pred_region
        %s169 = ssub.s32 %s14, 1
        // Predicated region
        $region13: #{tpu_custom_call.1} parent=11 // pred_check
          %p170 = pneg %p87
        $region14: #{tpu_custom_call.1} parent=11 // pred_check_branch
          %172 = sbr.rel (%p170) target = $region16
        $region15: #{tpu_custom_call.1} parent=11 // pred_region
          _
        $region16: #{tpu_custom_call.1} parent=11 // pred_fallthru
          _
        // Predicated region
        $region17: #{tpu_custom_call.1} parent=11 // pred_check
          %p173 = pneg %p108
        $region18: #{tpu_custom_call.1} parent=11 // pred_check_branch
          %175 = sbr.rel (%p173) target = $region20
        $region19: #{tpu_custom_call.1} parent=11 // pred_region
          _
        $region20: #{tpu_custom_call.1} parent=11 // pred_fallthru
          _
        // Predicated region
        $region21: #{tpu_custom_call.1} parent=11 // pred_check
          %p176 = pneg %p129
        $region22: #{tpu_custom_call.1} parent=11 // pred_check_branch
          %178 = sbr.rel (%p176) target = $region24
        $region23: #{tpu_custom_call.1} parent=11 // pred_region
          _
        $region24: #{tpu_custom_call.1} parent=11 // pred_fallthru
          _
      $region12: #{tpu_custom_call.1} parent=5 // pred_fallthru
        _
      %p179 = scmp.lt.s32.totalorder %s14, 2
      // Predicated region
      $region25: #{tpu_custom_call.1} parent=5 // pred_check
        %p180 = pneg %p179
      $region26: #{tpu_custom_call.1} parent=5 // pred_check_branch
        %182 = sbr.rel (%p180) target = $region28
      $region27: #{tpu_custom_call.1} parent=5 // pred_region
        // Predicated region
        $region29: #{tpu_custom_call.1} parent=27 // pred_check
          %p183 = pneg %p34
        $region30: #{tpu_custom_call.1} parent=27 // pred_check_branch
          %185 = sbr.rel (%p183) target = $region32
        $region31: #{tpu_custom_call.1} parent=27 // pred_region
          %p186 = scmp.lt.s32.totalorder %s14, 1
          %s187 = scalar_select %p186, %s14, 1
          %s188 = smul.addr %s187, 2
          %s189 = smul.addr %s188, 8
          %s190 = scalar_lea.vmem %s0, %s189
        $region32: #{tpu_custom_call.1} parent=27 // pred_fallthru
          _
        // Predicated region
        $region33: #{tpu_custom_call.1} parent=27 // pred_check
          %p191 = pneg %p60
        $region34: #{tpu_custom_call.1} parent=27 // pred_check_branch
          %193 = sbr.rel (%p191) target = $region36
        $region35: #{tpu_custom_call.1} parent=27 // pred_region
          %p194 = scmp.lt.s32.totalorder %s14, 1
          %s195 = scalar_select %p194, %s14, 1
          %s196 = smul.addr %s195, 4
          %s197 = smul.addr %s196, 8
          %s198 = scalar_lea.vmem %s1, %s197
        $region36: #{tpu_custom_call.1} parent=27 // pred_fallthru
          _
      $region28: #{tpu_custom_call.1} parent=5 // pred_fallthru
        _
      %p199 = scmp.le.s32.totalorder 1, %s14
      %p200 = scmp.lt.s32.totalorder %s14, 3
      %p201 = pnand %p199, %p200
      %p202 = pneg %p201
      // Predicated region
      $region37: #{tpu_custom_call.1} parent=5 // pred_check
        _
      $region38: #{tpu_custom_call.1} parent=5 // pred_check_branch
        %204 = sbr.rel (%p201) target = $region40
      $region39: #{tpu_custom_call.1} parent=5 // pred_region
        %s205 = ssub.s32 %s14, 1
        %p206 = scmp.lt.s32.totalorder %s19, 1
        %s207 = scalar_select %p206, %s19, 1
        %s208 = smul.addr %s207, 2
        %s209 = smul.addr %s208, 8
        %s210 = scalar_lea.vmem %s0, %s209
        %p211 = pneg %p40
        %p212 = pneg %p37
        %p213 = scmp.lt.s32.totalorder %s19, 1
        %s214 = scalar_select %p213, %s19, 1
        %s215 = smul.addr %s214, 4
        %s216 = smul.addr %s215, 8
        %s217 = scalar_lea.vmem %s1, %s216
        %p218 = pneg %p66
        %p219 = pneg %p63
        %p220 = pneg %p87
        %p221 = pneg %p84
        %p222 = pneg %p108
        %p223 = pneg %p105
        %p224 = pneg %p129
        %p225 = pneg %p126
        %p226 = pneg %p155
        %p227 = pneg %p152
        %s228 = sand.u32 %s142, 1
        %s229 = scalar_lea.sflag [#allocation4], %s228
        %s230 = sand.u32 %s142, 1
        %s231 = smul.addr %s230, 64
        %s232 = scalar_lea.vmem [#allocation3], %s231
        %p233 = scmp.lt.s32.totalorder %s19, 1
        %s234 = scalar_select %p233, %s19, 1
        %s235 = smul.addr %s234, 2
        %s236 = smul.addr %s235, 8
        %s237 = scalar_lea.vmem %s0, %s236
        %p238 = scmp.lt.s32.totalorder %s19, 1
        %s239 = scalar_select %p238, %s19, 1
        %s240 = smul.addr %s239, 4
        %s241 = smul.addr %s240, 8
        %s242 = scalar_lea.vmem %s1, %s241
        %v244 = vld [vmem:[%s237] sm:$0xff]
        %v245 = vld [vmem:[%s237 + $0x8] sm:$0xff]
        %v246 = vlaneseq
        %v247 = vshrl.u32 %v246, 7
        %v248 = vadd.s32 %v247, 8
        %v249 = vlaneseq
        %v250 = vshrl.u32 %v249, 7
        %v251 = vsub.s32 7, %v250
        %v252 = vrot.slane %v245, %v251
        %v253 = vpack.c.bf16 %v252, %v252
        %s254 = scalar_lea.vmem [#allocation2], 120
        %vm255 = vcmask 261120
        %256 = vst.msk [vmem:[%s254] sm:$0xff] %vm255, %v253
        %vm257 = vcmp.eq.s32.totalorder %v247, 14
        %vm258 = vcmp.eq.s32.totalorder %v248, 14
        %v259 = vlaneseq
        %v260 = vshrl.u32 %v259, 7
        %v261 = vsub.s32 6, %v260
        %v262 = vrot.slane %v245, %v261
        %v263 = vmax.f32 %v252, %v262
        %v264 = vsel %vm257, 1, 0
        %v265 = vsel %vm258, 1, 0
        %vm266 = vcmp.eq.s32.totalorder %v264, 1
        %vm267 = vcmp.eq.s32.totalorder %v265, 1
        %v268 = vsel %vm266, %v262, %v263
        %v269 = vsel %vm267, %v262, %v263
        %v270 = vpack.c.bf16 %v269, %v268
        %s271 = scalar_lea.vmem [#allocation2], 112
        %272 = vst.msk [vmem:[%s271] sm:$0xff] %vm255, %v270
        %vm273 = vcmp.eq.s32.totalorder %v247, 13
        %vm274 = vcmp.eq.s32.totalorder %v248, 13
        %v275 = vlaneseq
        %v276 = vshrl.u32 %v275, 7
        %v277 = vsub.s32 5, %v276
        %v278 = vrot.slane %v245, %v277
        %v279 = vmax.f32 %v268, %v278
        %v280 = vmax.f32 %v269, %v278
        %v281 = vsel %vm273, 1, 0
        %v282 = vsel %vm274, 1, 0
        %vm283 = vcmp.eq.s32.totalorder %v281, 1
        %vm284 = vcmp.eq.s32.totalorder %v282, 1
        %v285 = vsel %vm283, %v278, %v279
        %v286 = vsel %vm284, %v278, %v280
        %v287 = vpack.c.bf16 %v286, %v285
        %s288 = scalar_lea.vmem [#allocation2], 104
        %289 = vst.msk [vmem:[%s288] sm:$0xff] %vm255, %v287
        %vm290 = vcmp.eq.s32.totalorder %v247, 12
        %vm291 = vcmp.eq.s32.totalorder %v248, 12
        %v292 = vlaneseq
        %v293 = vshrl.u32 %v292, 7
        %v294 = vsub.s32 4, %v293
        %v295 = vrot.slane %v245, %v294
        %v296 = vmax.f32 %v285, %v295
        %v297 = vmax.f32 %v286, %v295
        %v298 = vsel %vm290, 1, 0
        %v299 = vsel %vm291, 1, 0
        %vm300 = vcmp.eq.s32.totalorder %v298, 1
        %vm301 = vcmp.eq.s32.totalorder %v299, 1
        %v302 = vsel %vm300, %v295, %v296
        %v303 = vsel %vm301, %v295, %v297
        %v304 = vpack.c.bf16 %v303, %v302
        %s305 = scalar_lea.vmem [#allocation2], 96
        %306 = vst.msk [vmem:[%s305] sm:$0xff] %vm255, %v304
        %vm307 = vcmp.eq.s32.totalorder %v247, 11
        %vm308 = vcmp.eq.s32.totalorder %v248, 11
        %v309 = vlaneseq
        %v310 = vshrl.u32 %v309, 7
        %v311 = vsub.s32 3, %v310
        %v312 = vrot.slane %v245, %v311
        %v313 = vmax.f32 %v302, %v312
        %v314 = vmax.f32 %v303, %v312
        %v315 = vsel %vm307, 1, 0
        %v316 = vsel %vm308, 1, 0
        %vm317 = vcmp.eq.s32.totalorder %v315, 1
        %vm318 = vcmp.eq.s32.totalorder %v316, 1
        %v319 = vsel %vm317, %v312, %v313
        %v320 = vsel %vm318, %v312, %v314
        %v321 = vpack.c.bf16 %v320, %v319
        %s322 = scalar_lea.vmem [#allocation2], 88
        %323 = vst.msk [vmem:[%s322] sm:$0xff] %vm255, %v321
        %vm324 = vcmp.eq.s32.totalorder %v247, 10
        %vm325 = vcmp.eq.s32.totalorder %v248, 10
        %v326 = vlaneseq
        %v327 = vshrl.u32 %v326, 7
        %v328 = vsub.s32 2, %v327
        %v329 = vrot.slane %v245, %v328
        %v330 = vmax.f32 %v319, %v329
        %v331 = vmax.f32 %v320, %v329
        %v332 = vsel %vm324, 1, 0
        %v333 = vsel %vm325, 1, 0
        %vm334 = vcmp.eq.s32.totalorder %v332, 1
        %vm335 = vcmp.eq.s32.totalorder %v333, 1
        %v336 = vsel %vm334, %v329, %v330
        %v337 = vsel %vm335, %v329, %v331
        %v338 = vpack.c.bf16 %v337, %v336
        %s339 = scalar_lea.vmem [#allocation2], 80
        %340 = vst.msk [vmem:[%s339] sm:$0xff] %vm255, %v338
        %vm341 = vcmp.eq.s32.totalorder %v247, 9
        %vm342 = vcmp.eq.s32.totalorder %v248, 9
        %v343 = vlaneseq
        %v344 = vshrl.u32 %v343, 7
        %v345 = vsub.s32 1, %v344
        %v346 = vrot.slane %v245, %v345
        %v347 = vmax.f32 %v336, %v346
        %v348 = vmax.f32 %v337, %v346
        %v349 = vsel %vm341, 1, 0
        %v350 = vsel %vm342, 1, 0
        %vm351 = vcmp.eq.s32.totalorder %v349, 1
        %vm352 = vcmp.eq.s32.totalorder %v350, 1
        %v353 = vsel %vm351, %v346, %v347
        %v354 = vsel %vm352, %v346, %v348
        %v355 = vpack.c.bf16 %v354, %v353
        %s356 = scalar_lea.vmem [#allocation2], 72
        %357 = vst.msk [vmem:[%s356] sm:$0xff] %vm255, %v355
        %vm358 = vcmp.eq.s32.totalorder %v247, 8
        %vm359 = vcmp.eq.s32.totalorder %v248, 8
        %v360 = vlaneseq
        %v361 = vshrl.u32 %v360, 7
        %v362 = vsub.s32 0, %v361
        %v363 = vrot.slane %v245, %v362
        %v364 = vmax.f32 %v353, %v363
        %v365 = vmax.f32 %v354, %v363
        %v366 = vsel %vm358, 1, 0
        %v367 = vsel %vm359, 1, 0
        %vm368 = vcmp.eq.s32.totalorder %v366, 1
        %vm369 = vcmp.eq.s32.totalorder %v367, 1
        %v370 = vsel %vm368, %v363, %v364
        %v371 = vsel %vm369, %v363, %v365
        %v372 = vpack.c.bf16 %v371, %v370
        %s373 = scalar_lea.vmem [#allocation2], 64
        %374 = vst.msk [vmem:[%s373] sm:$0xff] %vm255, %v372
        %vm375 = vcmp.eq.s32.totalorder %v247, 7
        %vm376 = vcmp.eq.s32.totalorder %v248, 7
        %v377 = vlaneseq
        %v378 = vshrl.u32 %v377, 7
        %v379 = vsub.s32 7, %v378
        %v380 = vrot.slane %v244, %v379
        %v381 = vmax.f32 %v370, %v380
        %v382 = vmax.f32 %v371, %v380
        %v383 = vsel %vm375, 1, 0
        %v384 = vsel %vm376, 1, 0
        %vm385 = vcmp.eq.s32.totalorder %v383, 1
        %vm386 = vcmp.eq.s32.totalorder %v384, 1
        %v387 = vsel %vm385, %v380, %v381
        %v388 = vsel %vm386, %v380, %v382
        %v389 = vpack.c.bf16 %v388, %v387
        %s390 = scalar_lea.vmem [#allocation2], 56
        %391 = vst.msk [vmem:[%s390] sm:$0xff] %vm255, %v389
        %vm392 = vcmp.eq.s32.totalorder %v247, 6
        %vm393 = vcmp.eq.s32.totalorder %v248, 6
        %v394 = vlaneseq
        %v395 = vshrl.u32 %v394, 7
        %v396 = vsub.s32 6, %v395
        %v397 = vrot.slane %v244, %v396
        %v398 = vmax.f32 %v387, %v397
        %v399 = vmax.f32 %v388, %v397
        %v400 = vsel %vm392, 1, 0
        %v401 = vsel %vm393, 1, 0
        %vm402 = vcmp.eq.s32.totalorder %v400, 1
        %vm403 = vcmp.eq.s32.totalorder %v401, 1
        %v404 = vsel %vm402, %v397, %v398
        %v405 = vsel %vm403, %v397, %v399
        %v406 = vpack.c.bf16 %v405, %v404
        %s407 = scalar_lea.vmem [#allocation2], 48
        %408 = vst.msk [vmem:[%s407] sm:$0xff] %vm255, %v406
        %vm409 = vcmp.eq.s32.totalorder %v247, 5
        %vm410 = vcmp.eq.s32.totalorder %v248, 5
        %v411 = vlaneseq
        %v412 = vshrl.u32 %v411, 7
        %v413 = vsub.s32 5, %v412
        %v414 = vrot.slane %v244, %v413
        %v415 = vmax.f32 %v404, %v414
        %v416 = vmax.f32 %v405, %v414
        %v417 = vsel %vm409, 1, 0
        %v418 = vsel %vm410, 1, 0
        %vm419 = vcmp.eq.s32.totalorder %v417, 1
        %vm420 = vcmp.eq.s32.totalorder %v418, 1
        %v421 = vsel %vm419, %v414, %v415
        %v422 = vsel %vm420, %v414, %v416
        %v423 = vpack.c.bf16 %v422, %v421
        %s424 = scalar_lea.vmem [#allocation2], 40
        %425 = vst.msk [vmem:[%s424] sm:$0xff] %vm255, %v423
        %vm426 = vcmp.eq.s32.totalorder %v247, 4
        %vm427 = vcmp.eq.s32.totalorder %v248, 4
        %v428 = vlaneseq
        %v429 = vshrl.u32 %v428, 7
        %v430 = vsub.s32 4, %v429
        %v431 = vrot.slane %v244, %v430
        %v432 = vmax.f32 %v421, %v431
        %v433 = vmax.f32 %v422, %v431
        %v434 = vsel %vm426, 1, 0
        %v435 = vsel %vm427, 1, 0
        %vm436 = vcmp.eq.s32.totalorder %v434, 1
        %vm437 = vcmp.eq.s32.totalorder %v435, 1
        %v438 = vsel %vm436, %v431, %v432
        %v439 = vsel %vm437, %v431, %v433
        %v440 = vpack.c.bf16 %v439, %v438
        %s441 = scalar_lea.vmem [#allocation2], 32
        %442 = vst.msk [vmem:[%s441] sm:$0xff] %vm255, %v440
        %vm443 = vcmp.eq.s32.totalorder %v247, 3
        %vm444 = vcmp.eq.s32.totalorder %v248, 3
        %v445 = vlaneseq
        %v446 = vshrl.u32 %v445, 7
        %v447 = vsub.s32 3, %v446
        %v448 = vrot.slane %v244, %v447
        %v449 = vmax.f32 %v438, %v448
        %v450 = vmax.f32 %v439, %v448
        %v451 = vsel %vm443, 1, 0
        %v452 = vsel %vm444, 1, 0
        %vm453 = vcmp.eq.s32.totalorder %v451, 1
        %vm454 = vcmp.eq.s32.totalorder %v452, 1
        %v455 = vsel %vm453, %v448, %v449
        %v456 = vsel %vm454, %v448, %v450
        %v457 = vpack.c.bf16 %v456, %v455
        %s458 = scalar_lea.vmem [#allocation2], 24
        %459 = vst.msk [vmem:[%s458] sm:$0xff] %vm255, %v457
        %vm460 = vcmp.eq.s32.totalorder %v247, 2
        %vm461 = vcmp.eq.s32.totalorder %v248, 2
        %v462 = vlaneseq
        %v463 = vshrl.u32 %v462, 7
        %v464 = vsub.s32 2, %v463
        %v465 = vrot.slane %v244, %v464
        %v466 = vmax.f32 %v455, %v465
        %v467 = vmax.f32 %v456, %v465
        %v468 = vsel %vm460, 1, 0
        %v469 = vsel %vm461, 1, 0
        %vm470 = vcmp.eq.s32.totalorder %v468, 1
        %vm471 = vcmp.eq.s32.totalorder %v469, 1
        %v472 = vsel %vm470, %v465, %v466
        %v473 = vsel %vm471, %v465, %v467
        %v474 = vpack.c.bf16 %v473, %v472
        %s475 = scalar_lea.vmem [#allocation2], 16
        %476 = vst.msk [vmem:[%s475] sm:$0xff] %vm255, %v474
        %vm477 = vcmp.eq.s32.totalorder %v247, 1
        %vm478 = vcmp.eq.s32.totalorder %v248, 1
        %v479 = vlaneseq
        %v480 = vshrl.u32 %v479, 7
        %v481 = vsub.s32 1, %v480
        %v482 = vrot.slane %v244, %v481
        %v483 = vmax.f32 %v472, %v482
        %v484 = vmax.f32 %v473, %v482
        %v485 = vsel %vm477, 1, 0
        %v486 = vsel %vm478, 1, 0
        %vm487 = vcmp.eq.s32.totalorder %v485, 1
        %vm488 = vcmp.eq.s32.totalorder %v486, 1
        %v489 = vsel %vm487, %v482, %v483
        %v490 = vsel %vm488, %v482, %v484
        %v491 = vpack.c.bf16 %v490, %v489
        %s492 = scalar_lea.vmem [#allocation2], 8
        %493 = vst.msk [vmem:[%s492] sm:$0xff] %vm255, %v491
        %vm494 = vcmp.eq.s32.totalorder %v247, 0
        %vm495 = vcmp.eq.s32.totalorder %v248, 0
        %v496 = vlaneseq
        %v497 = vshrl.u32 %v496, 7
        %v498 = vsub.s32 0, %v497
        %v499 = vrot.slane %v244, %v498
        %v500 = vmax.f32 %v489, %v499
        %v501 = vmax.f32 %v490, %v499
        %v502 = vsel %vm494, 1, 0
        %v503 = vsel %vm495, 1, 0
        %vm504 = vcmp.eq.s32.totalorder %v502, 1
        %vm505 = vcmp.eq.s32.totalorder %v503, 1
        %v506 = vsel %vm504, %v499, %v500
        %v507 = vsel %vm505, %v499, %v501
        %v508 = vpack.c.bf16 %v507, %v506
        %509 = vst.msk [vmem:[#allocation2] sm:$0xff] %vm255, %v508
        %v510 = vld [vmem:[#allocation2] sm:$0xff]
        %v511 = vld [vmem:[#allocation2 + $0x8] sm:$0xff]
        %v512 = vld [vmem:[#allocation2 + $0x10] sm:$0xff]
        %v513 = vld [vmem:[#allocation2 + $0x18] sm:$0xff]
        %v514 = vld [vmem:[#allocation2 + $0x20] sm:$0xff]
        %v515 = vld [vmem:[#allocation2 + $0x28] sm:$0xff]
        %v516 = vld [vmem:[#allocation2 + $0x30] sm:$0xff]
        %v517 = vld [vmem:[#allocation2 + $0x38] sm:$0xff]
        %v518 = vld [vmem:[#allocation2 + $0x40] sm:$0xff]
        %v519 = vld [vmem:[#allocation2 + $0x48] sm:$0xff]
        %v520 = vld [vmem:[#allocation2 + $0x50] sm:$0xff]
        %v521 = vld [vmem:[#allocation2 + $0x58] sm:$0xff]
        %v522 = vld [vmem:[#allocation2 + $0x60] sm:$0xff]
        %v523 = vld [vmem:[#allocation2 + $0x68] sm:$0xff]
        %v524 = vld [vmem:[#allocation2 + $0x70] sm:$0xff]
        %v525 = vld [vmem:[#allocation2 + $0x78] sm:$0xff]
        %v526 = vld [vmem:[%s2] sm:$0xf]
        %v527 = vld [vmem:[%s2 + $0x4] sm:$0xf]
        %v528 = vld [vmem:[%s2 + $0x8] sm:$0xf]
        %v529 = vld [vmem:[%s2 + $0xc] sm:$0xf]
        %v530 = vld [vmem:[%s3] sm:$0xff]
        %v531 = vld [vmem:[%s3 + $0x8] sm:$0xff]
        %v532 = vld [vmem:[%s3 + $0x10] sm:$0xff]
        %v533 = vld [vmem:[%s3 + $0x18] sm:$0xff]
        %535 = vset.pattern.permute.xlu0 0
        %536 = vperm.xlu0 %535, %v530
        %v537 = vpop.permute.xlu0 %536
        %540 = vset.pattern.permute.xlu0 0
        %541 = vperm.xlu0 %540, %v531
        %v542 = vpop.permute.xlu0 %541
        %545 = vset.pattern.permute.xlu0 0
        %546 = vperm.xlu0 %545, %v532
        %v547 = vpop.permute.xlu0 %546
        %550 = vset.pattern.permute.xlu0 0
        %551 = vperm.xlu0 %550, %v533
        %v552 = vpop.permute.xlu0 %551
        %v558 = vunpack.c.l.b16 %v526
        %v559 = vunpack.c.l.b16 %v527
        %v560 = vunpack.c.l.b16 %v528
        %v561 = vunpack.c.l.b16 %v529
        %v562 = vpack.c.b16 %v559, %v558
        %v563 = vpack.c.b16 %v561, %v560
        %v565 = vsel %vm255, %v562, 0
        %v568 = vsel %vm255, %v563, 0
        %v571 = vsel %vm255, %v510, 0
        %v574 = vsel %vm255, %v511, 0
        %v577 = vsel %vm255, %v512, 0
        %v580 = vsel %vm255, %v513, 0
        %v583 = vsel %vm255, %v514, 0
        %v586 = vsel %vm255, %v515, 0
        %v589 = vsel %vm255, %v516, 0
        %v592 = vsel %vm255, %v517, 0
        %v595 = vsel %vm255, %v518, 0
        %v598 = vsel %vm255, %v519, 0
        %v601 = vsel %vm255, %v520, 0
        %v604 = vsel %vm255, %v521, 0
        %v607 = vsel %vm255, %v522, 0
        %v610 = vsel %vm255, %v523, 0
        %v613 = vsel %vm255, %v524, 0
        %v616 = vsel %vm255, %v525, 0
        %618 = vmatprep.subr.bf16.mxu0 0
        %619 = vmatpush1.bf16.xpose.msra.mxu0 %v571
        %620 = vmatprep.subr.bf16.mxu0 0
        %621 = vmatpush1.bf16.xpose.msra.mxu0 %v574
        %622 = vmatprep.subr.bf16.mxu0 0
        %623 = vmatpush1.bf16.xpose.msra.mxu0 %v577
        %624 = vmatprep.subr.bf16.mxu0 0
        %625 = vmatpush1.bf16.xpose.msra.mxu0 %v580
        %626 = vmatprep.subr.bf16.mxu0 0
        %627 = vmatpush1.bf16.xpose.msra.mxu0 %v583
        %628 = vmatprep.subr.bf16.mxu0 0
        %629 = vmatpush1.bf16.xpose.msra.mxu0 %v586
        %630 = vmatprep.subr.bf16.mxu0 0
        %631 = vmatpush1.bf16.xpose.msra.mxu0 %v589
        %632 = vmatprep.subr.bf16.mxu0 0
        %633 = vmatpush1.bf16.xpose.msra.mxu0 %v592
        %634 = vmatprep.subr.bf16.mxu0 0
        %635 = vmatpush1.bf16.xpose.msra.mxu0 %v595
        %636 = vmatprep.subr.bf16.mxu0 0
        %637 = vmatpush1.bf16.xpose.msra.mxu0 %v598
        %638 = vmatprep.subr.bf16.mxu0 0
        %639 = vmatpush1.bf16.xpose.msra.mxu0 %v601
        %640 = vmatprep.subr.bf16.mxu0 0
        %641 = vmatpush1.bf16.xpose.msra.mxu0 %v604
        %642 = vmatprep.subr.bf16.mxu0 0
        %643 = vmatpush1.bf16.xpose.msra.mxu0 %v607
        %644 = vmatprep.subr.bf16.mxu0 0
        %645 = vmatpush1.bf16.xpose.msra.mxu0 %v610
        %646 = vmatprep.subr.bf16.mxu0 0
        %647 = vmatpush1.bf16.xpose.msra.mxu0 %v613
        %648 = vmatprep.subr.bf16.mxu0 0
        %649 = vmatpush1.bf16.xpose.msra.mxu0 %v616
        %650 = vmatprep.mubr.bf16.mxu0 0
        %651 = vmatmul.mubr.bf16.gmra.mrb[0].mxu0 %v565
        %v652 = vpop.f32.mrb[0].mxu0
        %v653 = vadd.f32 %v537, %v652
        %v654 = vpop.f32.mrb[0].mxu0
        %v655 = vadd.f32 %v537, %v654
        %v656 = vpop.f32.mrb[0].mxu0
        %v657 = vadd.f32 %v542, %v656
        %v658 = vpop.f32.mrb[0].mxu0
        %v659 = vadd.f32 %v542, %v658
        %660 = vmatprep.mubr.bf16.mxu0 0
        %661 = vmatmul.mubr.bf16.gmra.mrb[0].mxu0 %v568
        %v662 = vpop.f32.mrb[0].mxu0
        %v663 = vadd.f32 %v547, %v662
        %v664 = vpop.f32.mrb[0].mxu0
        %v665 = vadd.f32 %v547, %v664
        %v666 = vpop.f32.mrb[0].mxu0
        %v667 = vadd.f32 %v552, %v666
        %v668 = vpop.f32.mrb[0].mxu0
        %v669 = vadd.f32 %v552, %v668
        %670 = vdwg.mxu0
        %v671 = vld [vmem:[%s242] sm:$0xff]
        %v672 = vld [vmem:[%s242 + $0x8] sm:$0xff]
        %v673 = vld [vmem:[%s242 + $0x10] sm:$0xff]
        %v674 = vld [vmem:[%s242 + $0x18] sm:$0xff]
        %676 = vset.pattern.permute.xlu0 0
        %677 = vperm.xlu0 %676, %v671
        %v678 = vpop.permute.xlu0 %677
        %681 = vset.pattern.permute.xlu0 0
        %682 = vperm.xlu0 %681, %v672
        %v683 = vpop.permute.xlu0 %682
        %686 = vset.pattern.permute.xlu0 0
        %687 = vperm.xlu0 %686, %v673
        %v688 = vpop.permute.xlu0 %687
        %691 = vset.pattern.permute.xlu0 0
        %692 = vperm.xlu0 %691, %v674
        %v693 = vpop.permute.xlu0 %692
        %v695 = vmul.f32 %v653, %v678
        %v696 = vmul.f32 %v655, %v678
        %v697 = vmul.f32 %v657, %v683
        %v698 = vmul.f32 %v659, %v683
        %v699 = vmul.f32 %v663, %v688
        %v700 = vmul.f32 %v665, %v688
        %v701 = vmul.f32 %v667, %v693
        %v702 = vmul.f32 %v669, %v693
        %v703 = vmul.f32 %v695, %v695
        %v704 = vmul.f32 %v696, %v696
        %v705 = vmul.f32 %v697, %v697
        %v706 = vmul.f32 %v698, %v698
        %v707 = vmul.f32 %v699, %v699
        %v708 = vmul.f32 %v700, %v700
        %v709 = vmul.f32 %v701, %v701
        %v710 = vmul.f32 %v702, %v702
        %v711 = vadd.f32 %v703, %v705
        %v712 = vadd.f32 %v711, %v707
        %v713 = vadd.f32 %v712, %v709
        %v714 = vrot.slane %v713, 4
        %v715 = vadd.f32 %v713, %v714
        %v716 = vrot.slane %v715, 2
        %v717 = vadd.f32 %v715, %v716
        %v718 = vrot.slane %v717, 1
        %v719 = vadd.f32 %v717, %v718
        %v720 = vadd.f32 %v704, %v706
        %v721 = vadd.f32 %v720, %v708
        %v722 = vadd.f32 %v721, %v710
        %v723 = vrot.slane %v722, 4
        %v724 = vadd.f32 %v722, %v723
        %v725 = vrot.slane %v724, 2
        %v726 = vadd.f32 %v724, %v725
        %v727 = vrot.slane %v726, 1
        %v728 = vadd.f32 %v726, %v727
        %v729 = vmax.f32 %v719, 1e-24
        %v730 = vmax.f32 %v728, 1e-24
        %v731 = vrsqrt.pop %v729
        %v732 = vrsqrt.pop %v730
        %v733 = vmul.f32 %v695, %v731
        %v734 = vmul.f32 %v696, %v732
        %v735 = vmul.f32 %v697, %v731
        %v736 = vmul.f32 %v698, %v732
        %v737 = vmul.f32 %v699, %v731
        %v738 = vmul.f32 %v700, %v732
        %v739 = vmul.f32 %v701, %v731
        %v740 = vmul.f32 %v702, %v732
        %v741 = vld [vmem:[%s4] sm:$0x3]
        %v743 = vlaneseq
        %v744 = vshrl.u32 %v743, 7
        %v745 = vsub.s32 0, %v744
        %v746 = vrot.slane %v741, %v745
        %v747 = vlaneseq
        %v748 = vshrl.u32 %v747, 7
        %v749 = vsub.s32 1, %v748
        %v750 = vrot.slane %v741, %v749
        %v753 = vmul.f32 %v733, %v746
        %v754 = vmul.f32 %v734, %v750
        %v755 = vmul.f32 %v735, %v746
        %v756 = vmul.f32 %v736, %v750
        %v757 = vmul.f32 %v737, %v746
        %v758 = vmul.f32 %v738, %v750
        %v759 = vmul.f32 %v739, %v746
        %v760 = vmul.f32 %v740, %v750
        %761 = vst [vmem:[%s232] sm:$0xff] %v753
        %762 = vst [vmem:[%s232 + $0x8] sm:$0xff] %v754
        %763 = vst [vmem:[%s232 + $0x10] sm:$0xff] %v755
        %764 = vst [vmem:[%s232 + $0x18] sm:$0xff] %v756
        %765 = vst [vmem:[%s232 + $0x20] sm:$0xff] %v757
        %766 = vst [vmem:[%s232 + $0x28] sm:$0xff] %v758
        %767 = vst [vmem:[%s232 + $0x30] sm:$0xff] %v759
        %768 = vst [vmem:[%s232 + $0x38] sm:$0xff] %v760
        %s769 = sand.u32 %s142, 1
        %s770 = scalar_lea.sflag [#allocation4], %s769
        %s771 = sand.u32 %s142, 1
        %s772 = smul.addr %s771, 64
        %s773 = scalar_lea.vmem [#allocation3], %s772
        // Predicated region
        $region41: #{tpu_custom_call.1} parent=39 // pred_check
          %p774 = pneg %p152
        $region42: #{tpu_custom_call.1} parent=39 // pred_check_branch
          %776 = sbr.rel (%p774) target = $region44
        $region43: #{tpu_custom_call.1} parent=39 // pred_region
          %s778 = ssub.s32 1024, 1024
          %779 = vsyncadd %s770, %s778
          %s780 = smul.addr %s19, 8
          %s781 = smul.addr %s780, 128
          %s782 = scalar_lea.hbm %s5, %s781
          %s783 = sshll.u32 %s773, 4
          %s784 = int_to_ptr.vmem [resolvable:$true] %s783
          %789 = dma.vmem_to_hbm [thread:$0]  %s784, 1024, %s782, %s770, 256, 256, 16
        $region44: #{tpu_custom_call.1} parent=39 // pred_fallthru
          _
      $region40: #{tpu_custom_call.1} parent=5 // pred_fallthru
        _
      %p790 = scmp.le.s32.totalorder 2, %s14
      // Predicated region
      $region45: #{tpu_custom_call.1} parent=5 // pred_check
        %p791 = pneg %p790
      $region46: #{tpu_custom_call.1} parent=5 // pred_check_branch
        %793 = sbr.rel (%p791) target = $region48
      $region47: #{tpu_custom_call.1} parent=5 // pred_region
        %s794 = ssub.s32 %s14, 2
        // Predicated region
        $region49: #{tpu_custom_call.1} parent=47 // pred_check
          %p795 = pneg %p158
        $region50: #{tpu_custom_call.1} parent=47 // pred_check_branch
          %797 = sbr.rel (%p795) target = $region52
        $region51: #{tpu_custom_call.1} parent=47 // pred_region
          %s798 = sand.u32 %s143, 1
          %s799 = scalar_lea.sflag [#allocation4], %s798
          %s800 = sand.u32 %s143, 1
          %s801 = smul.addr %s800, 64
          %s802 = scalar_lea.vmem [#allocation3], %s801
          %803 = dma.done %s799, 1024
        $region52: #{tpu_custom_call.1} parent=47 // pred_fallthru
          _
      $region48: #{tpu_custom_call.1} parent=5 // pred_fallthru
        _
    $region6: #{tpu_custom_call.1} parent=1 // loop_footer
      %s18 = sadd.s32 1, %s14
    $region7: #{tpu_custom_call.1} parent=1 // loop_footer_branch
      %13 = sbr.rel target = $region3
    $region8: #{tpu_custom_call.1} parent=1 // loop_exit
      _
    %804 = vsyncpa [#allocation4], 1
    %s805 = scalar_lea.sflag [#allocation4], 1
    %806 = vsyncpa %s805, 1

</llo_original>
